<compile_context>
chip_gen: v7x
topology: tpu7x:2x2x1
jax: 0.10.0
libtpu: 0.0.40
codegen_flags: <defaults>
</compile_context>

<pallas_src>
import numpy as np
import jax
import jax.numpy as jnp
from jax.experimental import pallas as pl
from jax.experimental.pallas import tpu as pltpu


# itemsize (bytes) -> sublane packing; DMA chunk boundaries are kept multiples
# of this so every transfer stays tile-aligned for f32 / bf16 / int8.
_SUBLANE_PACK = {4: 8, 2: 16, 1: 32}

_MAX_DMA_CHUNKS = 8      # concurrent DMAs to drive per copy
_MAX_LANE_COLS = 8192    # cap on the lane-dense minor dim of the 2-D view


def _lane_dense_2d(total):
    """Pick a (rows, cols) 2-D view of a `total`-element contiguous buffer with
    a lane-dense (multiple-of-128) minor dim whenever the size allows it."""
    start = min(_MAX_LANE_COLS, (total // 128) * 128)
    for cols in range(start, 127, -128):
        if total % cols == 0:
            return total // cols, cols
    # Ragged total (no multiple-of-128 divisor): largest divisor <= 1024.
    # DMA engines move contiguous bytes, so correctness and bandwidth are
    # unaffected; this just keeps the row-chunked copy reasonably shaped.
    for cols in range(min(1024, total), 0, -1):
        if total % cols == 0:
            return total // cols, cols
    return 1, total  # unreachable (cols=1 always divides); kept for clarity


def _row_chunks(rows, sub, max_chunks):
    """Split `rows` into <= max_chunks contiguous (start, nrows) chunks whose
    starts are multiples of the sublane packing `sub`."""
    if rows <= sub:
        return [(0, rows)]
    n_sub_blocks = rows // sub
    n = max(1, min(max_chunks, n_sub_blocks))
    per = (n_sub_blocks // n) * sub
    chunks = []
    start = 0
    for i in range(n):
        nrows = per if i < n - 1 else rows - start
        chunks.append((start, nrows))
        start += nrows
    return chunks


def _make_dma_copy_kernel(chunks):
    """Kernel issuing one HBM->HBM async copy per static (start, nrows) chunk,
    overlapping all of them, then waiting.  No VMEM staging, no grid."""

    def kernel(x_hbm, o_hbm, sems):
        copies = []
        for i, (start, nrows) in enumerate(chunks):
            cp = pltpu.make_async_copy(
                x_hbm.at[pl.ds(start, nrows), :],
                o_hbm.at[pl.ds(start, nrows), :],
                sems.at[i],
            )
            cp.start()
            copies.append(cp)
        for cp in copies:
            cp.wait()

    return kernel


def unsqueeze_pallas(x, dim, *, copy=True):
    """Equivalent of torch.Tensor.unsqueeze(dim).

    copy=False  -> zero-cost metadata reshape (recommended; beats any kernel).
    copy=True   -> fresh buffer produced by a chunked HBM->HBM DMA Pallas kernel.
    """
    # Resolve negative dims the same way PyTorch does (valid range: [-(n+1), n]).
    n = x.ndim
    d = dim if dim >= 0 else dim + n + 1
    assert 0 <= d <= n, f"dim {dim} out of range for rank-{n} tensor"
    out_shape = list(x.shape)
    out_shape.insert(d, 1)

    if not copy or x.size == 0:
        # Pure metadata reshape; no HBM traffic at all.
        return jnp.reshape(x, out_shape)

    total = int(x.size)
    rows, cols = _lane_dense_2d(total)
    x2d = jnp.reshape(x, (rows, cols))  # free bitcast for contiguous layouts

    itemsize = jnp.dtype(x.dtype).itemsize
    sub = _SUBLANE_PACK.get(itemsize, 8)
    chunks = _row_chunks(rows, sub, _MAX_DMA_CHUNKS)

    y2d = pl.pallas_call(
        _make_dma_copy_kernel(chunks),
        out_shape=jax.ShapeDtypeStruct((rows, cols), x.dtype),
        in_specs=[pl.BlockSpec(memory_space=pl.ANY)],   # raw HBM ref, no auto-DMA
        out_specs=pl.BlockSpec(memory_space=pl.ANY),
        scratch_shapes=[pltpu.SemaphoreType.DMA((len(chunks),))],
        cost_estimate=pl.CostEstimate(
            flops=0, transcendentals=0, bytes_accessed=2 * total * itemsize),
    )(x2d)

    # The unsqueeze itself: metadata-only reshape (glue).
    return jnp.reshape(y2d, out_shape)


class Unsqueeze:
    """Thin module-style wrapper mirroring the PyTorch spec."""

    def __init__(self, dim):
        self.dim = dim

    def __call__(self, x):
        return unsqueeze_pallas(x, self.dim)


if __name__ == "__main__":
    key = jax.random.PRNGKey(0)
    # Example input consistent with an NCHW activation: batch=2, channels=4, 16x16.
    x = jax.random.normal(key, (2, 4, 16, 16), dtype=jnp.float32)

    mod = Unsqueeze(dim=1)           # (2, 4, 16, 16) -> (2, 1, 4, 16, 16)
    y = jax.block_until_ready(mod(x))
    ref = jnp.expand_dims(x, 1)
    assert y.shape == ref.shape, (y.shape, ref.shape)
    assert y.dtype == ref.dtype
    np.testing.assert_array_equal(np.asarray(y), np.asarray(ref))

    # Negative dim, matching PyTorch semantics.
    y_neg = jax.block_until_ready(unsqueeze_pallas(x, -1))
    np.testing.assert_array_equal(np.asarray(y_neg), np.asarray(jnp.expand_dims(x, -1)))

    # Larger ragged bf16 input (element count not a multiple of 128): exercises
    # the ragged factorisation + chunked DMA path.
    x_big = jax.random.normal(jax.random.PRNGKey(1), (3, 5, 7, 96), dtype=jnp.bfloat16)
    y_big = jax.block_until_ready(unsqueeze_pallas(x_big, 2))
    np.testing.assert_array_equal(np.asarray(y_big), np.asarray(jnp.expand_dims(x_big, 2)))

    # Zero-copy fast path (no kernel, pure metadata).
    y_fast = jax.block_until_ready(unsqueeze_pallas(x, 1, copy=False))
    np.testing.assert_array_equal(np.asarray(y_fast), np.asarray(ref))

    print("KERNEL_OK")
</pallas_src>

<mosaic_0001>
module attributes {stable_mosaic.version = 11 : i64} {
  func.func @kernel(%arg0: memref<1x2048xf32, #tpu.memory_space<any>>, %arg1: memref<1x2048xf32, #tpu.memory_space<any>>, %arg2: memref<1x!tpu.dma_semaphore, #tpu.memory_space<semaphore_mem>>) attributes {dimension_semantics = [], scalar_prefetch = 0 : i64, scratch_operands = 1 : i64, tpu.core_type = #tpu.core_type<tc>} {
    %c0_i32 = arith.constant 0 : i32
    %c0_i32_0 = arith.constant 0 : i32
    %c0_i32_1 = arith.constant 0 : i32
    %0 = tpu.memref_slice %arg0[%c0_i32_0, %c0_i32_1] : memref<1x2048xf32, #tpu.memory_space<any>> -> memref<1x2048xf32, #tpu.memory_space<any>>
    %c0_i32_2 = arith.constant 0 : i32
    %c0_i32_3 = arith.constant 0 : i32
    %1 = tpu.memref_slice %arg1[%c0_i32_2, %c0_i32_3] : memref<1x2048xf32, #tpu.memory_space<any>> -> memref<1x2048xf32, #tpu.memory_space<any>>
    %2 = tpu.memref_slice %arg2[%c0_i32] : memref<1x!tpu.dma_semaphore, #tpu.memory_space<semaphore_mem>> -> memref<1x!tpu.dma_semaphore, #tpu.memory_space<semaphore_mem>>
    %3 = tpu.memref_squeeze %2 : memref<1x!tpu.dma_semaphore, #tpu.memory_space<semaphore_mem>> -> memref<!tpu.dma_semaphore, #tpu.memory_space<semaphore_mem>>
    tpu.enqueue_dma source(%0 : memref<1x2048xf32, #tpu.memory_space<any>>) target(%1 : memref<1x2048xf32, #tpu.memory_space<any>>) target_semaphore(%3 : memref<!tpu.dma_semaphore, #tpu.memory_space<semaphore_mem>>)
    %c0_i32_4 = arith.constant 0 : i32
    %c0_i32_5 = arith.constant 0 : i32
    %c0_i32_6 = arith.constant 0 : i32
    %4 = tpu.memref_slice %arg0[%c0_i32_5, %c0_i32_6] : memref<1x2048xf32, #tpu.memory_space<any>> -> memref<1x2048xf32, #tpu.memory_space<any>>
    %c0_i32_7 = arith.constant 0 : i32
    %c0_i32_8 = arith.constant 0 : i32
    %5 = tpu.memref_slice %arg1[%c0_i32_7, %c0_i32_8] : memref<1x2048xf32, #tpu.memory_space<any>> -> memref<1x2048xf32, #tpu.memory_space<any>>
    %6 = tpu.memref_slice %arg2[%c0_i32_4] : memref<1x!tpu.dma_semaphore, #tpu.memory_space<semaphore_mem>> -> memref<1x!tpu.dma_semaphore, #tpu.memory_space<semaphore_mem>>
    %7 = tpu.memref_squeeze %6 : memref<1x!tpu.dma_semaphore, #tpu.memory_space<semaphore_mem>> -> memref<!tpu.dma_semaphore, #tpu.memory_space<semaphore_mem>>
    tpu.wait_dma2 semaphore(%7 : memref<!tpu.dma_semaphore, #tpu.memory_space<semaphore_mem>>) src(%4 : memref<1x2048xf32, #tpu.memory_space<any>>) dst(%5 : memref<1x2048xf32, #tpu.memory_space<any>>)
    return
  }
}

</mosaic_0001>

<llo_original>
// kernel: tpu_custom_call.1
$region0: #{tpu_custom_call.1}
  #allocation0 [shape = 'u32[]', space=smem, size = 0x4, offset = 0x4, fixed_abs, tag = 'smem constant byte address 0x4 - core index']
  #allocation1 [shape = 'u32[144,128]{1,0:T(1,128)}', space=vmem, size = 0x12000, scoped, tag = 'internal scratch']
  #allocation2 [shape = 's32[1]{0}', space=sflag, size = 0x4, scoped, tag = 'scratch operand']
  #allocation3 [shape = 's32[]', space=sflag, size = 0x4, offset = 0, fixed_abs, tag = 'sflag constant byte address 0x0 - dummy sync flag']
  #allocation4 [shape = 'u32[0]{0}', space=smem, size = 0, offset = 0, fixed_abs, tag = 'smem constant byte address 0x0 - null']
  %s0 = inlined_call_operand.hbm [shape: f32[1,2048], index: 0, kind: input, shape index: {}]
  %s1 = inlined_call_operand.hbm [shape: f32[1,2048], index: 1, kind: output, shape index: {}]
  %s2 = sld [smem:[#allocation0]]
  $region2: #{tpu_custom_call.1} parent=0
    _
  %s4 = ssub.s32 1, %s2
  %s5 = scalar_select 0, %s4, %s2
  %s7 = sshll.u32 1, 14
  %s8 = sxor.u32 4294967295, %s7
  %s11 = sshll.u32 3, 24
  %s12 = sxor.u32 4294967295, %s11
  %s13 = sand.u32 0, %s12
  %s15 = sor.u32 %s13, 0
  %18 = dma.general %s0, 256, %s1, [#allocation2], [#allocation3], [#allocation4], %s15, 0
  %s19 = smul.u32 1, 16
  %s20 = sshll.u32 %s19, 4
  %21 = dma.done [#allocation2], %s20
  %22 = vsyncmov [#allocation2]
  %s23 = vpop.sfrf %22
  %p24 = scmp.eq.s32.totalorder %s23, 0
  %p25 = pneg %p24
  %27 = shalt.err (%p25)

</llo_original>
